<compile_context>
chip_gen: v7x
topology: tpu7x:2x2x1
jax: 0.10.0
libtpu: 0.0.40
codegen_flags: <defaults>
</compile_context>

<pallas_src>
import functools

import jax
import jax.numpy as jnp
import numpy as np
from jax import lax
from jax.experimental import pallas as pl
from jax.experimental.pallas import tpu as pltpu


def _ced_kernel(tgt_ref, ls_ref, lt_ref, out_ref, *,
                alpha, beta, T, gamma, b_total, tb, needs_mask):
    TB, C = ls_ref.shape
    eps = 1e-8
    inv_T = 1.0 / T

    tgt = tgt_ref[...]                                        # (TB, 1) int32
    cols = lax.broadcasted_iota(jnp.int32, (TB, C), 1)
    is_tgt = cols == tgt                                      # bool one-hot (never f32-materialized)

    ls = ls_ref[...].astype(jnp.float32) * inv_T
    lt = lt_ref[...].astype(jnp.float32) * inv_T

    # --- one exp pass per input; EXACT row normalization ---------------------
    ms = jnp.max(ls, axis=1, keepdims=True)
    es = jnp.exp(ls - ms)
    ses = jnp.sum(es, axis=1, keepdims=True)
    ps = es * (1.0 / ses)                                     # softmax(student)

    mt = jnp.max(lt, axis=1, keepdims=True)
    et = jnp.exp(lt - mt)
    set_ = jnp.sum(et, axis=1, keepdims=True)
    pt = et * (1.0 / set_)                                    # softmax(teacher)

    # --- target-column masses; identities replace the other-mask reductions --
    s1 = jnp.sum(jnp.where(is_tgt, ps, 0.0), axis=1, keepdims=True)
    t1 = jnp.sum(jnp.where(is_tgt, pt, 0.0), axis=1, keepdims=True)
    s2 = 1.0 - s1
    t2 = 1.0 - t1

    # --- TCKD: binary (target vs non-target) KL, xlogy-guarded ---------------
    log_s1 = jnp.log(s1 + eps)
    log_s2 = jnp.log(s2 + eps)
    kl_bin = (jnp.where(t1 > 0.0,
                        t1 * (jnp.log(jnp.where(t1 > 0.0, t1, 1.0)) - log_s1),
                        0.0)
              + jnp.where(t2 > 0.0,
                          t2 * (jnp.log(jnp.where(t2 > 0.0, t2, 1.0)) - log_s2),
                          0.0))                               # (TB, 1)

    # --- agreement weights -----------------------------------------------------
    if float(gamma) == 2.0:
        # sqrt(x+eps)**2 == x+eps; sum_j(ps*pt*other + eps) == sum(ps*pt) - s1*t1 + C*eps
        aw_sum = jnp.sum(ps * pt, axis=1, keepdims=True) - s1 * t1 + (C * eps)
    else:
        prod = jnp.where(is_tgt, 0.0, ps * pt)
        aw = jnp.exp((0.5 * float(gamma)) * jnp.log(prod + eps))
        aw_sum = jnp.sum(aw, axis=1, keepdims=True)

    # --- NCKD without the -1000 mask trick and without materializing pt2 -----
    #   pt2_j = pt_j / t2 (j != target), log ps2_j = ls_j - (lse_s + log s2)
    #   kl_row = (sum_j pt_j*d_j - t1*d_t)/t2 - c_row,   d = lt - ls
    d = lt - ls
    ptd_sum = jnp.sum(pt * d, axis=1, keepdims=True)
    d_t = jnp.sum(jnp.where(is_tgt, d, 0.0), axis=1, keepdims=True)
    lse_s = ms + jnp.log(ses)
    lse_t = mt + jnp.log(set_)
    t2c = jnp.maximum(t2, 1e-30)
    s2c = jnp.maximum(s2, 1e-30)
    c_row = (lse_t + jnp.log(t2c)) - (lse_s + jnp.log(s2c))   # (TB, 1)
    kl_row = (ptd_sum - t1 * d_t) / t2c - c_row               # (TB, 1)

    # --- mask padded rows, reduce, write per-block partial --------------------
    if needs_mask:
        row = lax.broadcasted_iota(jnp.int32, (TB, 1), 0)
        valid = ((pl.program_id(0) * tb + row) < b_total).astype(jnp.float32)
        kl_bin = kl_bin * valid
        kl_row_w = kl_row * aw_sum * valid
    else:
        kl_row_w = kl_row * aw_sum

    tckd_part = jnp.sum(kl_bin, axis=(0, 1), keepdims=True)    # (1, 1)
    nckd_part = jnp.sum(kl_row_w, axis=(0, 1), keepdims=True)  # (1, 1)
    partial = (alpha * tckd_part + beta * nckd_part) * (T * T / b_total)

    # select/iota-free lane-dense write: every element of this block's (8,128)
    # tile carries the block partial; the wrapper reads one element per block.
    out_ref[...] = jnp.broadcast_to(partial, (8, 128)).astype(jnp.float32)


def _round_up(x, m):
    return ((x + m - 1) // m) * m


def _vmem_capacity_bytes():
    try:
        return int(pltpu.get_tpu_info().vmem_capacity_bytes)
    except Exception:
        return 64 * 1024 * 1024          # conservative fallback (v7x per-TensorCore)


def _choose_tb(B, C, itemsize, vmem_bytes):
    # Size the batch tile against what actually lives in VMEM:
    #   * 2 streamed inputs x 2 pipeline buffers at the input dtype
    #   * ~8 live f32 (TB, C) intermediates (ls/lt, es/et, ps/pt, d, products)
    # Big tiles (>= ~1 MiB streamed per step, up to 2048 rows) amortize the
    # ~0.35 us per-grid-step overhead and keep HBM DMA near roofline.
    budget = int(vmem_bytes * 0.6)
    per_row = C * (2 * 2 * itemsize + 8 * 4)
    tb = budget // max(per_row, 1)
    tb = (tb // 8) * 8
    tb = max(8, min(2048, tb))
    b_pad8 = _round_up(B, 8)
    tb = min(tb, b_pad8)
    if b_pad8 > 8:
        # keep >= 2 blocks when the batch allows it so v7x's 2 TensorCores
        # (dimension_semantics=("parallel",)) both get work.
        tb = min(tb, _round_up((b_pad8 + 1) // 2, 8))
    return max(8, tb)


def ced_loss(logits_student, logits_teacher, target,
             alpha=1.0, beta=2.0, temperature=3.0, gamma=2.0):
    assert logits_student.shape == logits_teacher.shape, \
        "Student and teacher logits must have same shape"
    B, C = logits_student.shape
    itemsize = jnp.dtype(logits_student.dtype).itemsize
    vmem_bytes = _vmem_capacity_bytes()
    tb = _choose_tb(B, C, itemsize, vmem_bytes)
    b_pad = _round_up(B, tb)
    nb = b_pad // tb

    tg = target.reshape(-1).astype(jnp.int32)
    if b_pad != B:
        pad = b_pad - B
        ls = jnp.pad(logits_student, ((0, pad), (0, 0)))
        lt = jnp.pad(logits_teacher, ((0, pad), (0, 0)))
        tg = jnp.pad(tg, (0, pad))
    else:
        ls, lt = logits_student, logits_teacher
    # TODO(synk): pass targets lane-dense ((nb, tb) blocks) instead of a (tb, 1)
    # lane-padded tile; negligible at these shapes.
    tg2 = tg.reshape(b_pad, 1)

    kernel = functools.partial(
        _ced_kernel, alpha=float(alpha), beta=float(beta),
        T=float(temperature), gamma=float(gamma),
        b_total=B, tb=tb, needs_mask=(b_pad != B))

    vmem_limit = min(int(vmem_bytes * 3 // 4), 96 * 1024 * 1024)

    out = pl.pallas_call(
        kernel,
        out_shape=jax.ShapeDtypeStruct((nb * 8, 128), jnp.float32),
        grid=(nb,),
        in_specs=[
            pl.BlockSpec((tb, 1), lambda i: (i, 0)),
            pl.BlockSpec((tb, C), lambda i: (i, 0)),
            pl.BlockSpec((tb, C), lambda i: (i, 0)),
        ],
        out_specs=pl.BlockSpec((8, 128), lambda i: (i, 0)),
        compiler_params=pltpu.CompilerParams(
            dimension_semantics=("parallel",),
            vmem_limit_bytes=vmem_limit),
    )(tg2, ls, lt)
    # every element of block i's (8,128) tile equals that block's partial.
    return jnp.sum(out.reshape(nb, 8, 128)[:, 0, 0])


def _ced_loss_ref(ls, lt, target, alpha=1.0, beta=2.0, T=3.0, gamma=2.0):
    # pure-JAX reference mirroring the PyTorch forward (original -1000 mask form)
    B, C = ls.shape
    gt = jax.nn.one_hot(target, C, dtype=jnp.float32)
    other = 1.0 - gt
    ps = jax.nn.softmax(ls / T, axis=1)
    pt = jax.nn.softmax(lt / T, axis=1)
    agreement = jnp.sqrt((ps * other) * (pt * other) + 1e-8)
    aw = agreement ** gamma
    s_cat = jnp.stack([(ps * gt).sum(1), (ps * other).sum(1)], 1)
    t_cat = jnp.stack([(pt * gt).sum(1), (pt * other).sum(1)], 1)
    log_s = jnp.log(s_cat + 1e-8)
    kl = jnp.where(t_cat > 0,
                   t_cat * (jnp.log(jnp.where(t_cat > 0, t_cat, 1.0)) - log_s),
                   0.0)
    tckd = kl.sum() * T * T / B
    pt2 = jax.nn.softmax(lt / T - 1000.0 * gt, axis=1) * other
    log_ps2 = jax.nn.log_softmax(ls / T - 1000.0 * gt, axis=1)
    kl2 = jnp.where(pt2 > 0,
                    pt2 * (jnp.log(jnp.where(pt2 > 0, pt2, 1.0)) - log_ps2),
                    0.0)
    nckd = (kl2.sum(1) * aw.sum(1)).sum() * T * T / B
    return alpha * tckd + beta * nckd


if __name__ == "__main__":
    key = jax.random.PRNGKey(0)
    k1, k2, k3 = jax.random.split(key, 3)
    B, C = 8, 128
    logits_student = jax.random.normal(k1, (B, C), dtype=jnp.float32)
    logits_teacher = jax.random.normal(k2, (B, C), dtype=jnp.float32)
    target = jax.random.randint(k3, (B,), 0, C, dtype=jnp.int32)

    loss = ced_loss(logits_student, logits_teacher, target)
    jax.block_until_ready(loss)

    loss_ref = _ced_loss_ref(logits_student, logits_teacher, target)
    np.testing.assert_allclose(np.asarray(loss), np.asarray(loss_ref),
                               rtol=2e-3, atol=2e-5)
    print("KERNEL_OK")
</pallas_src>

<mosaic_0001>
module attributes {stable_mosaic.version = 11 : i64} {
  func.func @_ced_kernel(%arg0: i32, %arg1: memref<8x1xi32, #tpu.memory_space<vmem>>, %arg2: memref<8x128xf32, #tpu.memory_space<vmem>>, %arg3: memref<8x128xf32, #tpu.memory_space<vmem>>, %arg4: memref<8x128xf32, #tpu.memory_space<vmem>>) attributes {dimension_semantics = [#tpu.dimension_semantics<parallel>], iteration_bounds = array<i64: 1>, scalar_prefetch = 0 : i64, scratch_operands = 0 : i64, tpu.core_type = #tpu.core_type<tc>, window_params = [{transform_indices = @transform_0, window_bounds = array<i64: 8, 1>}, {transform_indices = @transform_1, window_bounds = array<i64: 8, 128>}, {transform_indices = @transform_2, window_bounds = array<i64: 8, 128>}, {transform_indices = @transform_3, window_bounds = array<i64: 8, 128>}]} {
    %c0 = arith.constant 0 : index
    %c0_0 = arith.constant 0 : index
    %0 = vector.load %arg1[%c0, %c0_0] : memref<8x1xi32, #tpu.memory_space<vmem>>, vector<8x1xi32>
    %1 = tpu.iota {dimensions = array<i32: 1>} : vector<8x128xi32>
    %2 = vector.broadcast %0 : vector<8x1xi32> to vector<8x128xi32>
    %3 = arith.cmpi eq, %1, %2 : vector<8x128xi32>
    %c0_1 = arith.constant 0 : index
    %c0_2 = arith.constant 0 : index
    %4 = vector.load %arg2[%c0_1, %c0_2] : memref<8x128xf32, #tpu.memory_space<vmem>>, vector<8x128xf32>
    %cst = arith.constant 0.333333343 : f32
    %5 = vector.broadcast %cst : f32 to vector<8x128xf32>
    %6 = arith.mulf %4, %5 : vector<8x128xf32>
    %c0_3 = arith.constant 0 : index
    %c0_4 = arith.constant 0 : index
    %7 = vector.load %arg3[%c0_3, %c0_4] : memref<8x128xf32, #tpu.memory_space<vmem>>, vector<8x128xf32>
    %cst_5 = arith.constant 0.333333343 : f32
    %8 = vector.broadcast %cst_5 : f32 to vector<8x128xf32>
    %9 = arith.mulf %7, %8 : vector<8x128xf32>
    %cst_6 = arith.constant dense<0xFF800000> : vector<8xf32>
    %10 = vector.multi_reduction <maximumf>, %6, %cst_6 [1] : vector<8x128xf32> to vector<8xf32>
    %11 = vector.shape_cast %10 : vector<8xf32> to vector<8x1xf32>
    %12 = vector.broadcast %11 : vector<8x1xf32> to vector<8x128xf32>
    %13 = arith.subf %6, %12 : vector<8x128xf32>
    %14 = math.exp %13 : vector<8x128xf32>
    %cst_7 = arith.constant dense<0.000000e+00> : vector<8xf32>
    %15 = vector.multi_reduction <add>, %14, %cst_7 [1] : vector<8x128xf32> to vector<8xf32>
    %16 = vector.shape_cast %15 : vector<8xf32> to vector<8x1xf32>
    %cst_8 = arith.constant 1.000000e+00 : f32
    %17 = vector.broadcast %cst_8 : f32 to vector<8x1xf32>
    %18 = arith.divf %17, %16 : vector<8x1xf32>
    %19 = vector.broadcast %18 : vector<8x1xf32> to vector<8x128xf32>
    %20 = arith.mulf %14, %19 : vector<8x128xf32>
    %cst_9 = arith.constant dense<0xFF800000> : vector<8xf32>
    %21 = vector.multi_reduction <maximumf>, %9, %cst_9 [1] : vector<8x128xf32> to vector<8xf32>
    %22 = vector.shape_cast %21 : vector<8xf32> to vector<8x1xf32>
    %23 = vector.broadcast %22 : vector<8x1xf32> to vector<8x128xf32>
    %24 = arith.subf %9, %23 : vector<8x128xf32>
    %25 = math.exp %24 : vector<8x128xf32>
    %cst_10 = arith.constant dense<0.000000e+00> : vector<8xf32>
    %26 = vector.multi_reduction <add>, %25, %cst_10 [1] : vector<8x128xf32> to vector<8xf32>
    %27 = vector.shape_cast %26 : vector<8xf32> to vector<8x1xf32>
    %cst_11 = arith.constant 1.000000e+00 : f32
    %28 = vector.broadcast %cst_11 : f32 to vector<8x1xf32>
    %29 = arith.divf %28, %27 : vector<8x1xf32>
    %30 = vector.broadcast %29 : vector<8x1xf32> to vector<8x128xf32>
    %31 = arith.mulf %25, %30 : vector<8x128xf32>
    %cst_12 = arith.constant 0.000000e+00 : f32
    %32 = vector.broadcast %cst_12 : f32 to vector<8x128xf32>
    %33 = arith.select %3, %20, %32 : vector<8x128xi1>, vector<8x128xf32>
    %cst_13 = arith.constant dense<0.000000e+00> : vector<8xf32>
    %34 = vector.multi_reduction <add>, %33, %cst_13 [1] : vector<8x128xf32> to vector<8xf32>
    %35 = vector.shape_cast %34 : vector<8xf32> to vector<8x1xf32>
    %cst_14 = arith.constant 0.000000e+00 : f32
    %36 = vector.broadcast %cst_14 : f32 to vector<8x128xf32>
    %37 = arith.select %3, %31, %36 : vector<8x128xi1>, vector<8x128xf32>
    %cst_15 = arith.constant dense<0.000000e+00> : vector<8xf32>
    %38 = vector.multi_reduction <add>, %37, %cst_15 [1] : vector<8x128xf32> to vector<8xf32>
    %39 = vector.shape_cast %38 : vector<8xf32> to vector<8x1xf32>
    %cst_16 = arith.constant 1.000000e+00 : f32
    %40 = vector.broadcast %cst_16 : f32 to vector<8x1xf32>
    %41 = arith.subf %40, %35 : vector<8x1xf32>
    %cst_17 = arith.constant 1.000000e+00 : f32
    %42 = vector.broadcast %cst_17 : f32 to vector<8x1xf32>
    %43 = arith.subf %42, %39 : vector<8x1xf32>
    %cst_18 = arith.constant 9.99999993E-9 : f32
    %44 = vector.broadcast %cst_18 : f32 to vector<8x1xf32>
    %45 = arith.addf %35, %44 : vector<8x1xf32>
    %46 = math.log %45 : vector<8x1xf32>
    %cst_19 = arith.constant 9.99999993E-9 : f32
    %47 = vector.broadcast %cst_19 : f32 to vector<8x1xf32>
    %48 = arith.addf %41, %47 : vector<8x1xf32>
    %49 = math.log %48 : vector<8x1xf32>
    %cst_20 = arith.constant 0.000000e+00 : f32
    %50 = vector.broadcast %cst_20 : f32 to vector<8x1xf32>
    %51 = arith.cmpf ogt, %39, %50 : vector<8x1xf32>
    %cst_21 = arith.constant 0.000000e+00 : f32
    %52 = vector.broadcast %cst_21 : f32 to vector<8x1xf32>
    %53 = arith.cmpf ogt, %39, %52 : vector<8x1xf32>
    %cst_22 = arith.constant 1.000000e+00 : f32
    %54 = vector.broadcast %cst_22 : f32 to vector<8x1xf32>
    %55 = arith.select %53, %39, %54 : vector<8x1xi1>, vector<8x1xf32>
    %56 = math.log %55 : vector<8x1xf32>
    %57 = arith.subf %56, %46 : vector<8x1xf32>
    %58 = arith.mulf %39, %57 : vector<8x1xf32>
    %cst_23 = arith.constant 0.000000e+00 : f32
    %59 = vector.broadcast %cst_23 : f32 to vector<8x1xf32>
    %60 = arith.select %51, %58, %59 : vector<8x1xi1>, vector<8x1xf32>
    %cst_24 = arith.constant 0.000000e+00 : f32
    %61 = vector.broadcast %cst_24 : f32 to vector<8x1xf32>
    %62 = arith.cmpf ogt, %43, %61 : vector<8x1xf32>
    %cst_25 = arith.constant 0.000000e+00 : f32
    %63 = vector.broadcast %cst_25 : f32 to vector<8x1xf32>
    %64 = arith.cmpf ogt, %43, %63 : vector<8x1xf32>
    %cst_26 = arith.constant 1.000000e+00 : f32
    %65 = vector.broadcast %cst_26 : f32 to vector<8x1xf32>
    %66 = arith.select %64, %43, %65 : vector<8x1xi1>, vector<8x1xf32>
    %67 = math.log %66 : vector<8x1xf32>
    %68 = arith.subf %67, %49 : vector<8x1xf32>
    %69 = arith.mulf %43, %68 : vector<8x1xf32>
    %cst_27 = arith.constant 0.000000e+00 : f32
    %70 = vector.broadcast %cst_27 : f32 to vector<8x1xf32>
    %71 = arith.select %62, %69, %70 : vector<8x1xi1>, vector<8x1xf32>
    %72 = arith.addf %60, %71 : vector<8x1xf32>
    %73 = arith.mulf %20, %31 : vector<8x128xf32>
    %cst_28 = arith.constant dense<0.000000e+00> : vector<8xf32>
    %74 = vector.multi_reduction <add>, %73, %cst_28 [1] : vector<8x128xf32> to vector<8xf32>
    %75 = vector.shape_cast %74 : vector<8xf32> to vector<8x1xf32>
    %76 = arith.mulf %35, %39 : vector<8x1xf32>
    %77 = arith.subf %75, %76 : vector<8x1xf32>
    %cst_29 = arith.constant 1.280000e-06 : f32
    %78 = vector.broadcast %cst_29 : f32 to vector<8x1xf32>
    %79 = arith.addf %77, %78 : vector<8x1xf32>
    %80 = arith.subf %9, %6 : vector<8x128xf32>
    %81 = arith.mulf %31, %80 : vector<8x128xf32>
    %cst_30 = arith.constant dense<0.000000e+00> : vector<8xf32>
    %82 = vector.multi_reduction <add>, %81, %cst_30 [1] : vector<8x128xf32> to vector<8xf32>
    %83 = vector.shape_cast %82 : vector<8xf32> to vector<8x1xf32>
    %cst_31 = arith.constant 0.000000e+00 : f32
    %84 = vector.broadcast %cst_31 : f32 to vector<8x128xf32>
    %85 = arith.select %3, %80, %84 : vector<8x128xi1>, vector<8x128xf32>
    %cst_32 = arith.constant dense<0.000000e+00> : vector<8xf32>
    %86 = vector.multi_reduction <add>, %85, %cst_32 [1] : vector<8x128xf32> to vector<8xf32>
    %87 = vector.shape_cast %86 : vector<8xf32> to vector<8x1xf32>
    %88 = math.log %16 : vector<8x1xf32>
    %89 = arith.addf %11, %88 : vector<8x1xf32>
    %90 = math.log %27 : vector<8x1xf32>
    %91 = arith.addf %22, %90 : vector<8x1xf32>
    %cst_33 = arith.constant 1.000000e-30 : f32
    %92 = vector.broadcast %cst_33 : f32 to vector<8x1xf32>
    %93 = arith.maximumf %43, %92 : vector<8x1xf32>
    %cst_34 = arith.constant 1.000000e-30 : f32
    %94 = vector.broadcast %cst_34 : f32 to vector<8x1xf32>
    %95 = arith.maximumf %41, %94 : vector<8x1xf32>
    %96 = math.log %93 : vector<8x1xf32>
    %97 = arith.addf %91, %96 : vector<8x1xf32>
    %98 = math.log %95 : vector<8x1xf32>
    %99 = arith.addf %89, %98 : vector<8x1xf32>
    %100 = arith.subf %97, %99 : vector<8x1xf32>
    %101 = arith.mulf %39, %87 : vector<8x1xf32>
    %102 = arith.subf %83, %101 : vector<8x1xf32>
    %103 = arith.divf %102, %93 : vector<8x1xf32>
    %104 = arith.subf %103, %100 : vector<8x1xf32>
    %105 = arith.mulf %104, %79 : vector<8x1xf32>
    %106 = vector.shape_cast %72 : vector<8x1xf32> to vector<1x8x1xf32>
    %cst_35 = arith.constant dense<0.000000e+00> : vector<1xf32>
    %107 = vector.multi_reduction <add>, %106, %cst_35 [1, 2] : vector<1x8x1xf32> to vector<1xf32>
    %108 = vector.shape_cast %107 : vector<1xf32> to vector<1x1x1xf32>
    %109 = vector.extract %108[0, 0, 0] : f32 from vector<1x1x1xf32>
    %110 = vector.broadcast %109 : f32 to vector<1x1xf32>
    %111 = vector.shape_cast %105 : vector<8x1xf32> to vector<1x8x1xf32>
    %cst_36 = arith.constant dense<0.000000e+00> : vector<1xf32>
    %112 = vector.multi_reduction <add>, %111, %cst_36 [1, 2] : vector<1x8x1xf32> to vector<1xf32>
    %113 = vector.shape_cast %112 : vector<1xf32> to vector<1x1x1xf32>
    %114 = vector.extract %113[0, 0, 0] : f32 from vector<1x1x1xf32>
    %115 = vector.broadcast %114 : f32 to vector<1x1xf32>
    %cst_37 = arith.constant 1.000000e+00 : f32
    %116 = vector.broadcast %cst_37 : f32 to vector<1x1xf32>
    %117 = arith.mulf %116, %110 : vector<1x1xf32>
    %cst_38 = arith.constant 2.000000e+00 : f32
    %118 = vector.broadcast %cst_38 : f32 to vector<1x1xf32>
    %119 = arith.mulf %118, %115 : vector<1x1xf32>
    %120 = arith.addf %117, %119 : vector<1x1xf32>
    %cst_39 = arith.constant 1.125000e+00 : f32
    %121 = vector.broadcast %cst_39 : f32 to vector<1x1xf32>
    %122 = arith.mulf %120, %121 : vector<1x1xf32>
    %123 = vector.shape_cast %122 : vector<1x1xf32> to vector<1x1xf32>
    %124 = vector.broadcast %123 : vector<1x1xf32> to vector<8x128xf32>
    %c0_40 = arith.constant 0 : index
    %c0_41 = arith.constant 0 : index
    %125 = vector.load %arg4[%c0_40, %c0_41] : memref<8x128xf32, #tpu.memory_space<vmem>>, vector<8x128xf32>
    tpu.vector_store %arg4[%c0_40, %c0_41], %124 {strides = array<i32>} : memref<8x128xf32, #tpu.memory_space<vmem>>, vector<8x128xf32>,
    return
  }
  func.func @transform_0(%arg0: i32) -> (i32, i32) {
    %c0_i32 = arith.constant 0 : i32
    %c0_i32_0 = arith.constant 0 : i32
    return %arg0, %c0_i32 : i32, i32
  }
  func.func @transform_1(%arg0: i32) -> (i32, i32) {
    %c0_i32 = arith.constant 0 : i32
    %c0_i32_0 = arith.constant 0 : i32
    return %arg0, %c0_i32 : i32, i32
  }
  func.func @transform_2(%arg0: i32) -> (i32, i32) {
    %c0_i32 = arith.constant 0 : i32
    %c0_i32_0 = arith.constant 0 : i32
    return %arg0, %c0_i32 : i32, i32
  }
  func.func @transform_3(%arg0: i32) -> (i32, i32) {
    %c0_i32 = arith.constant 0 : i32
    %c0_i32_0 = arith.constant 0 : i32
    return %arg0, %c0_i32 : i32, i32
  }
}

</mosaic_0001>

<llo_original>
// kernel: tpu_custom_call.1
$region0: #{tpu_custom_call.1}
  #allocation0 [shape = 'u32[]', space=smem, size = 0x4, offset = 0x4, fixed_abs, tag = 'smem constant byte address 0x4 - core index']
  #allocation1 [shape = 'u32[144,128]{1,0:T(1,128)}', space=vmem, size = 0x12000, scoped, tag = 'internal scratch']
  %s0 = inlined_call_operand.vmem [shape: s32[8,1], index: 0, kind: input, shape index: {}]
  %s1 = inlined_call_operand.vmem [shape: f32[8,128], index: 1, kind: input, shape index: {}]
  %s2 = inlined_call_operand.vmem [shape: f32[8,128], index: 2, kind: input, shape index: {}]
  %s3 = inlined_call_operand.hbm [shape: f32[8,128], index: 3, kind: output, shape index: {}]
  %s4 = sld [smem:[#allocation0]]
  $region22: #{tpu_custom_call.1} parent=0
    _
  %s6 = ssub.s32 1, %s4
  %s7 = scalar_select 0, %s6, %s4
  $region1: #{tpu_custom_call.1} parent=0
    #allocation2 [shape = 'u8[4096]{0}', space=vmem, size = 0x1000, scoped, tag = 'output window, operand 0, single buffered']
    #allocation3 [shape = 's32[1]{0}', space=sflag, size = 0x4, scoped, tag = 'scoped memory for tpu_custom_call.1']
    %8 = vsyncpa [#allocation3], 0
    // Predicated region
    $region2: #{tpu_custom_call.1} parent=1 // pred_check
      _
    $region3: #{tpu_custom_call.1} parent=1 // pred_check_branch
      %10 = sbr.rel (0) target = $region5
    $region4: #{tpu_custom_call.1} parent=1 // pred_region
      _
    $region5: #{tpu_custom_call.1} parent=1 // pred_fallthru
      _
    // Predicated region
    $region6: #{tpu_custom_call.1} parent=1 // pred_check
      _
    $region7: #{tpu_custom_call.1} parent=1 // pred_check_branch
      %12 = sbr.rel (0) target = $region9
    $region8: #{tpu_custom_call.1} parent=1 // pred_region
      _
    $region9: #{tpu_custom_call.1} parent=1 // pred_fallthru
      _
    // Predicated region
    $region10: #{tpu_custom_call.1} parent=1 // pred_check
      _
    $region11: #{tpu_custom_call.1} parent=1 // pred_check_branch
      %14 = sbr.rel (0) target = $region13
    $region12: #{tpu_custom_call.1} parent=1 // pred_region
      _
    $region13: #{tpu_custom_call.1} parent=1 // pred_fallthru
      _
    %v15 = vld [vmem:[%s0] sm:$0xff]
    %v16 = vlaneseq
    %v17 = vand.u32 %v16, 127
    %18 = vset.pattern.permute.xlu0 0
    %19 = vperm.xlu0 %18, %v15
    %v20 = vpop.permute.xlu0 %19
    %vm21 = vcmp.eq.s32.totalorder %v17, %v20
    %v22 = vld [vmem:[%s1] sm:$0xff]
    %v23 = vmul.f32 %v22, 0.33333334
    %v24 = vld [vmem:[%s2] sm:$0xff]
    %v25 = vmul.f32 %v24, 0.33333334
    %26 = vmax.xlane.f32.xlu0 %v23
    %v27 = vpop.xlane.xlu0 %26
    %v28 = vsub.f32 %v23, %v27
    %v29 = vmul.f32 %v28, 1.442695
    %v30 = vpow.pop %v29
    %31 = vadd.xlane.f32.xlu0 %v30
    %v32 = vpop.xlane.xlu0 %31
    %v33 = vrcp.pop %v32
    %v34 = vmul.f32 1.0, %v33
    %v35 = vmul.f32 %v30, %v34
    %36 = vmax.xlane.f32.xlu0 %v25
    %v37 = vpop.xlane.xlu0 %36
    %v38 = vsub.f32 %v25, %v37
    %v39 = vmul.f32 %v38, 1.442695
    %v40 = vpow.pop %v39
    %41 = vadd.xlane.f32.xlu0 %v40
    %v42 = vpop.xlane.xlu0 %41
    %v43 = vrcp.pop %v42
    %v44 = vmul.f32 1.0, %v43
    %v45 = vmul.f32 %v40, %v44
    %v46 = vsel %vm21, %v35, 0.0
    %47 = vadd.xlane.f32.xlu0 %v46
    %v48 = vpop.xlane.xlu0 %47
    %v49 = vsel %vm21, %v45, 0.0
    %50 = vadd.xlane.f32.xlu0 %v49
    %v51 = vpop.xlane.xlu0 %50
    %v52 = vsub.f32 1.0, %v48
    %v53 = vsub.f32 1.0, %v51
    %v54 = vadd.f32 %v48, 1e-08
    %v55 = vlog2.pop %v54
    %v56 = vmul.f32 %v55, 0.6931472
    %v57 = vadd.f32 %v52, 1e-08
    %v58 = vlog2.pop %v57
    %v59 = vmul.f32 %v58, 0.6931472
    %vm60 = vcmp.gt.f32.partialorder %v51, 0.0
    %v61 = vsel %vm60, %v51, 1.0
    %v62 = vlog2.pop %v61
    %v63 = vmul.f32 %v62, 0.6931472
    %v64 = vsub.f32 %v63, %v56
    %v65 = vmul.f32 %v51, %v64
    %v66 = vsel %vm60, %v65, 0.0
    %vm67 = vcmp.gt.f32.partialorder %v53, 0.0
    %v68 = vsel %vm67, %v53, 1.0
    %v69 = vlog2.pop %v68
    %v70 = vmul.f32 %v69, 0.6931472
    %v71 = vsub.f32 %v70, %v59
    %v72 = vmul.f32 %v53, %v71
    %v73 = vsel %vm67, %v72, 0.0
    %v74 = vadd.f32 %v66, %v73
    %v75 = vmul.f32 %v35, %v45
    %76 = vadd.xlane.f32.xlu0 %v75
    %v77 = vpop.xlane.xlu0 %76
    %v78 = vmul.f32 %v48, %v51
    %v79 = vsub.f32 %v77, %v78
    %v80 = vadd.f32 %v79, 1.28e-06
    %v81 = vsub.f32 %v25, %v23
    %v82 = vmul.f32 %v45, %v81
    %83 = vadd.xlane.f32.xlu0 %v82
    %v84 = vpop.xlane.xlu0 %83
    %v85 = vsel %vm21, %v81, 0.0
    %86 = vadd.xlane.f32.xlu0 %v85
    %v87 = vpop.xlane.xlu0 %86
    %v88 = vlog2.pop %v32
    %v89 = vmul.f32 %v88, 0.6931472
    %v90 = vadd.f32 %v27, %v89
    %v91 = vlog2.pop %v42
    %v92 = vmul.f32 %v91, 0.6931472
    %v93 = vadd.f32 %v37, %v92
    %v94 = vmax.f32 %v53, 1e-30
    %v95 = vmax.f32 %v52, 1e-30
    %v96 = vlog2.pop %v94
    %v97 = vmul.f32 %v96, 0.6931472
    %v98 = vadd.f32 %v93, %v97
    %v99 = vlog2.pop %v95
    %v100 = vmul.f32 %v99, 0.6931472
    %v101 = vadd.f32 %v90, %v100
    %v102 = vsub.f32 %v98, %v101
    %v103 = vmul.f32 %v51, %v87
    %v104 = vsub.f32 %v84, %v103
    %v105 = vrcp.pop %v94
    %v106 = vmul.f32 %v104, %v105
    %v107 = vsub.f32 %v106, %v102
    %v108 = vmul.f32 %v107, %v80
    %vm109 = vcmask 7168
    %v110 = vsel %vm109, %v74, 0.0
    %111 = vadd.xlane.f32.xlu0 %v110
    %v112 = vpop.xlane.xlu0 %111
    %v113 = vrot.slane %v112, 4
    %v114 = vadd.f32 %v112, %v113
    %v115 = vrot.slane %v114, 2
    %v116 = vadd.f32 %v114, %v115
    %v117 = vrot.slane %v116, 1
    %v118 = vadd.f32 %v116, %v117
    %s119 = vtos %v118
    %v120 = vstv %s119
    %v121 = vsel %vm109, %v108, 0.0
    %122 = vadd.xlane.f32.xlu0 %v121
    %v123 = vpop.xlane.xlu0 %122
    %v124 = vrot.slane %v123, 4
    %v125 = vadd.f32 %v123, %v124
    %v126 = vrot.slane %v125, 2
    %v127 = vadd.f32 %v125, %v126
    %v128 = vrot.slane %v127, 1
    %v129 = vadd.f32 %v127, %v128
    %s130 = vtos %v129
    %v131 = vstv %s130
    %v132 = vmul.f32 %v131, 2.0
    %v133 = vadd.f32 %v120, %v132
    %v134 = vmul.f32 %v133, 1.125
    %135 = vst [vmem:[#allocation2] sm:$0xff] %v134
    // Predicated region
    $region14: #{tpu_custom_call.1} parent=1 // pred_check
      _
    $region15: #{tpu_custom_call.1} parent=1 // pred_check_branch
      %137 = sbr.rel (0) target = $region17
    $region16: #{tpu_custom_call.1} parent=1 // pred_region
      %s139 = ssub.s32 128, 128
      %140 = vsyncadd [#allocation3], %s139
      %s142 = sshll.u32 [#allocation2], 4
      %s143 = int_to_ptr.vmem [resolvable:$true] %s142
      %145 = dma.vmem_to_hbm [thread:$0]  %s143, 128, %s3, [#allocation3]
    $region17: #{tpu_custom_call.1} parent=1 // pred_fallthru
      _
    // Predicated region
    $region18: #{tpu_custom_call.1} parent=1 // pred_check
      _
    $region19: #{tpu_custom_call.1} parent=1 // pred_check_branch
      %147 = sbr.rel (0) target = $region21
    $region20: #{tpu_custom_call.1} parent=1 // pred_region
      %148 = dma.done [#allocation3], 128
    $region21: #{tpu_custom_call.1} parent=1 // pred_fallthru
      _
    %149 = vsyncpa [#allocation3], 1

</llo_original>
